<compile_context>
chip_gen: v7x
topology: tpu7x:2x2x1
jax: 0.10.0
libtpu: 0.0.40
codegen_flags: <defaults>
</compile_context>

<pallas_src>
import jax
import jax.numpy as jnp
from jax.experimental import pallas as pl
from jax.experimental.pallas import tpu as pltpu

IN_FEATURES = 12
HIDDEN = [24, 24]
OUT_FEATURES = 3
N_LAYERS = 3
LANE = 128  # TPU lane width: pad feature dims so stores are lane-dense


def _round_up(n, m):
    return (n + m - 1) // m * m


def mlp_kernel(x_ref, w_ref, b_ref, o_ref):
    """Fused 3-layer MLP on one batch tile.

    x_ref: (TB, IN_FEATURES)   activation tile
    w_ref: (3, LANE, LANE)     zero-padded (in, out) weight slab, layer-major
    b_ref: (3, LANE)           zero-padded bias slab
    o_ref: (TB, LANE)          lane-dense output tile (cols >= OUT_FEATURES are 0)
    """
    x = x_ref[...]                                   # (TB, 12)
    w0 = w_ref[0][:IN_FEATURES, :]                   # (12, 128), cols >= 24 are 0
    h = jnp.dot(x, w0, preferred_element_type=jnp.float32) + b_ref[0:1, :]
    h = jnp.maximum(h, 0.0)                          # (TB, 128); padded lanes stay 0
    h = jnp.dot(h, w_ref[1], preferred_element_type=jnp.float32) + b_ref[1:2, :]
    h = jnp.maximum(h, 0.0)
    y = jnp.dot(h, w_ref[2], preferred_element_type=jnp.float32) + b_ref[2:3, :]
    o_ref[...] = y.astype(o_ref.dtype)


def mlp_forward(x, packed_params, *, tb=1024):
    """x: (B, IN_FEATURES) f32 -> (B, OUT_FEATURES) f32."""
    w_slab, b_slab = packed_params
    B = x.shape[0]
    TB = min(tb, _round_up(B, 8))        # batch tile: multiple of 8 sublanes
    B_pad = _round_up(B, TB)             # pad batch so the grid tiles evenly
    if B_pad != B:
        x = jnp.pad(x, ((0, B_pad - B), (0, 0)))
    grid = (B_pad // TB,)

    out = pl.pallas_call(
        mlp_kernel,
        out_shape=jax.ShapeDtypeStruct((B_pad, LANE), x.dtype),
        grid=grid,
        in_specs=[
            pl.BlockSpec((TB, IN_FEATURES), lambda i: (i, 0)),
            # Constant index maps: weight/bias slabs DMA'd once, VMEM-resident.
            pl.BlockSpec((N_LAYERS, LANE, LANE), lambda i: (0, 0, 0)),
            pl.BlockSpec((N_LAYERS, LANE), lambda i: (0, 0)),
        ],
        out_specs=pl.BlockSpec((TB, LANE), lambda i: (i, 0)),
        compiler_params=pltpu.CompilerParams(
            dimension_semantics=("parallel",),       # megacore-shard batch on v7x
            vmem_limit_bytes=32 * 1024 * 1024,
        ),
    )(x, w_slab, b_slab)
    return out[:B, :OUT_FEATURES]


def init_params(key):
    """Deterministic init mimicking nn.Linear's U(-1/sqrt(fan_in), 1/sqrt(fan_in))."""
    sizes = [IN_FEATURES] + HIDDEN + [OUT_FEATURES]
    params = []
    for i in range(len(sizes) - 1):
        fan_in, fan_out = sizes[i], sizes[i + 1]
        key, kw, kb = jax.random.split(key, 3)
        bound = 1.0 / (fan_in ** 0.5)
        w = jax.random.uniform(kw, (fan_in, fan_out), jnp.float32, -bound, bound)
        b = jax.random.uniform(kb, (fan_out,), jnp.float32, -bound, bound)
        params.append((w, b))
    return params


def pack_params(params):
    """Zero-pad and pack the 3 (w, b) pairs into two lane-aligned slabs."""
    w_slab = jnp.zeros((N_LAYERS, LANE, LANE), jnp.float32)
    b_slab = jnp.zeros((N_LAYERS, LANE), jnp.float32)
    for i, (w, b) in enumerate(params):
        w_slab = w_slab.at[i, : w.shape[0], : w.shape[1]].set(w)
        b_slab = b_slab.at[i, : b.shape[0]].set(b)
    return w_slab, b_slab


def reference_forward(x, params):
    (w0, b0), (w1, b1), (w2, b2) = params
    h = jnp.maximum(x @ w0 + b0, 0.0)
    h = jnp.maximum(h @ w1 + b1, 0.0)
    return h @ w2 + b2


if __name__ == "__main__":
    key = jax.random.PRNGKey(0)
    key, kx = jax.random.split(key)
    params = init_params(key)
    packed = pack_params(params)

    # Small shape consistent with the module (batch=8, in_features=12).
    B = 8
    x = jax.random.normal(kx, (B, IN_FEATURES), jnp.float32)
    out = jax.block_until_ready(mlp_forward(x, packed))
    ref = reference_forward(x, params)
    assert out.shape == (B, OUT_FEATURES)
    assert jnp.allclose(out, ref, atol=1e-5, rtol=1e-5)

    # Larger, non-multiple-of-tile batch to exercise the grid + padding path.
    key, kx2 = jax.random.split(key)
    B2 = 300
    x2 = jax.random.normal(kx2, (B2, IN_FEATURES), jnp.float32)
    out2 = jax.block_until_ready(mlp_forward(x2, packed, tb=128))
    ref2 = reference_forward(x2, params)
    assert out2.shape == (B2, OUT_FEATURES)
    assert jnp.allclose(out2, ref2, atol=1e-5, rtol=1e-5)

    print("KERNEL_OK")
</pallas_src>

<mosaic_0001>
module attributes {stable_mosaic.version = 11 : i64} {
  func.func @mlp_kernel(%arg0: i32, %arg1: memref<8x12xf32, #tpu.memory_space<vmem>>, %arg2: memref<3x128x128xf32, #tpu.memory_space<vmem>>, %arg3: memref<3x128xf32, #tpu.memory_space<vmem>>, %arg4: memref<8x128xf32, #tpu.memory_space<vmem>>) attributes {dimension_semantics = [#tpu.dimension_semantics<parallel>], iteration_bounds = array<i64: 1>, scalar_prefetch = 0 : i64, scratch_operands = 0 : i64, tpu.core_type = #tpu.core_type<tc>, window_params = [{transform_indices = @transform_0, window_bounds = array<i64: 8, 12>}, {pipeline_mode = #tpu.pipeline_mode<synchronous>, transform_indices = @transform_1, window_bounds = array<i64: 3, 128, 128>}, {pipeline_mode = #tpu.pipeline_mode<synchronous>, transform_indices = @transform_2, window_bounds = array<i64: 3, 128>}, {transform_indices = @transform_3, window_bounds = array<i64: 8, 128>}]} {
    %c0 = arith.constant 0 : index
    %c0_0 = arith.constant 0 : index
    %0 = vector.load %arg1[%c0, %c0_0] : memref<8x12xf32, #tpu.memory_space<vmem>>, vector<8x12xf32>
    %c0_1 = arith.constant 0 : index
    %c0_2 = arith.constant 0 : index
    %c0_3 = arith.constant 0 : index
    %1 = vector.load %arg2[%c0_1, %c0_2, %c0_3] : memref<3x128x128xf32, #tpu.memory_space<vmem>>, vector<1x128x128xf32>
    %2 = vector.shape_cast %1 : vector<1x128x128xf32> to vector<128x128xf32>
    %3 = vector.extract_strided_slice %2 {offsets = [0, 0], sizes = [12, 128], strides = [1, 1]} : vector<128x128xf32> to vector<12x128xf32>
    %cst = arith.constant dense<0.000000e+00> : vector<8x128xf32>
    %4 = tpu.matmul %0, %3, %cst {dimension_numbers = #tpu.dot_dimension_numbers<[1], [0], [0], [1], [0, 0, 1, 1], [], []>} : vector<8x12xf32>, vector<12x128xf32>, vector<8x128xf32> -> vector<8x128xf32>
    %c0_4 = arith.constant 0 : index
    %c0_5 = arith.constant 0 : index
    %5 = vector.load %arg3[%c0_4, %c0_5] : memref<3x128xf32, #tpu.memory_space<vmem>>, vector<1x128xf32>
    %6 = vector.broadcast %5 : vector<1x128xf32> to vector<8x128xf32>
    %7 = arith.addf %4, %6 : vector<8x128xf32>
    %cst_6 = arith.constant 0.000000e+00 : f32
    %8 = vector.broadcast %cst_6 : f32 to vector<8x128xf32>
    %9 = arith.maximumf %7, %8 : vector<8x128xf32>
    %c1 = arith.constant 1 : index
    %c0_7 = arith.constant 0 : index
    %c0_8 = arith.constant 0 : index
    %10 = vector.load %arg2[%c1, %c0_7, %c0_8] : memref<3x128x128xf32, #tpu.memory_space<vmem>>, vector<1x128x128xf32>
    %11 = vector.shape_cast %10 : vector<1x128x128xf32> to vector<128x128xf32>
    %cst_9 = arith.constant dense<0.000000e+00> : vector<8x128xf32>
    %12 = tpu.matmul %9, %11, %cst_9 {dimension_numbers = #tpu.dot_dimension_numbers<[1], [0], [0], [1], [0, 0, 1, 1], [], []>} : vector<8x128xf32>, vector<128x128xf32>, vector<8x128xf32> -> vector<8x128xf32>
    %c1_10 = arith.constant 1 : index
    %c0_11 = arith.constant 0 : index
    %13 = vector.load %arg3[%c1_10, %c0_11] : memref<3x128xf32, #tpu.memory_space<vmem>>, vector<1x128xf32>
    %14 = vector.broadcast %13 : vector<1x128xf32> to vector<8x128xf32>
    %15 = arith.addf %12, %14 : vector<8x128xf32>
    %cst_12 = arith.constant 0.000000e+00 : f32
    %16 = vector.broadcast %cst_12 : f32 to vector<8x128xf32>
    %17 = arith.maximumf %15, %16 : vector<8x128xf32>
    %c2 = arith.constant 2 : index
    %c0_13 = arith.constant 0 : index
    %c0_14 = arith.constant 0 : index
    %18 = vector.load %arg2[%c2, %c0_13, %c0_14] : memref<3x128x128xf32, #tpu.memory_space<vmem>>, vector<1x128x128xf32>
    %19 = vector.shape_cast %18 : vector<1x128x128xf32> to vector<128x128xf32>
    %cst_15 = arith.constant dense<0.000000e+00> : vector<8x128xf32>
    %20 = tpu.matmul %17, %19, %cst_15 {dimension_numbers = #tpu.dot_dimension_numbers<[1], [0], [0], [1], [0, 0, 1, 1], [], []>} : vector<8x128xf32>, vector<128x128xf32>, vector<8x128xf32> -> vector<8x128xf32>
    %c2_16 = arith.constant 2 : index
    %c0_17 = arith.constant 0 : index
    %21 = vector.load %arg3[%c2_16, %c0_17] : memref<3x128xf32, #tpu.memory_space<vmem>>, vector<1x128xf32>
    %22 = vector.broadcast %21 : vector<1x128xf32> to vector<8x128xf32>
    %23 = arith.addf %20, %22 : vector<8x128xf32>
    %c0_18 = arith.constant 0 : index
    %c0_19 = arith.constant 0 : index
    %24 = vector.load %arg4[%c0_18, %c0_19] : memref<8x128xf32, #tpu.memory_space<vmem>>, vector<8x128xf32>
    tpu.vector_store %arg4[%c0_18, %c0_19], %23 {strides = array<i32>} : memref<8x128xf32, #tpu.memory_space<vmem>>, vector<8x128xf32>,
    return
  }
  func.func @transform_0(%arg0: i32) -> (i32, i32) {
    %c0_i32 = arith.constant 0 : i32
    %c0_i32_0 = arith.constant 0 : i32
    return %arg0, %c0_i32 : i32, i32
  }
  func.func @transform_1(%arg0: i32) -> (i32, i32, i32) {
    %c0_i32 = arith.constant 0 : i32
    %c0_i32_0 = arith.constant 0 : i32
    %c0_i32_1 = arith.constant 0 : i32
    %c0_i32_2 = arith.constant 0 : i32
    return %c0_i32, %c0_i32_0, %c0_i32_1 : i32, i32, i32
  }
  func.func @transform_2(%arg0: i32) -> (i32, i32) {
    %c0_i32 = arith.constant 0 : i32
    %c0_i32_0 = arith.constant 0 : i32
    %c0_i32_1 = arith.constant 0 : i32
    return %c0_i32, %c0_i32_0 : i32, i32
  }
  func.func @transform_3(%arg0: i32) -> (i32, i32) {
    %c0_i32 = arith.constant 0 : i32
    %c0_i32_0 = arith.constant 0 : i32
    return %arg0, %c0_i32 : i32, i32
  }
}

</mosaic_0001>

<llo_original>
// kernel: tpu_custom_call.1
$region0: #{tpu_custom_call.1}
  #allocation0 [shape = 'u32[]', space=smem, size = 0x4, offset = 0x4, fixed_abs, tag = 'smem constant byte address 0x4 - core index']
  #allocation1 [shape = 'u32[144,128]{1,0:T(1,128)}', space=vmem, size = 0x12000, scoped, tag = 'internal scratch']
  %s0 = inlined_call_operand.hbm [shape: f32[8,12], index: 0, kind: input, shape index: {}]
  %s1 = inlined_call_operand.hbm [shape: f32[3,128,128], index: 1, kind: input, shape index: {}]
  %s2 = inlined_call_operand.vmem [shape: f32[3,128], index: 2, kind: input, shape index: {}]
  %s3 = inlined_call_operand.hbm [shape: f32[8,128], index: 3, kind: output, shape index: {}]
  %s4 = sld [smem:[#allocation0]]
  $region30: #{tpu_custom_call.1} parent=0
    _
  %s6 = ssub.s32 1, %s4
  %s7 = scalar_select 0, %s6, %s4
  $region1: #{tpu_custom_call.1} parent=0
    #allocation2 [shape = 'u8[4096]{0}', space=vmem, size = 0x1000, scoped, tag = 'input window, operand 0, single buffered']
    #allocation3 [shape = 's32[1]{0}', space=sflag, size = 0x4, scoped, tag = 'scoped memory for tpu_custom_call.1']
    #allocation4 [shape = 's32[1]{0}', space=sflag, size = 0x4, scoped, tag = 'scoped memory for tpu_custom_call.1']
    #allocation5 [shape = 'u8[196608]{0}', space=vmem, size = 0x30000, scoped, tag = 'input window, operand 1, single buffered']
    #allocation6 [shape = 's32[1]{0}', space=sflag, size = 0x4, scoped, tag = 'scoped memory for tpu_custom_call.1']
    #allocation7 [shape = 'u8[4096]{0}', space=vmem, size = 0x1000, scoped, tag = 'output window, operand 0, single buffered']
    %8 = vsyncpa [#allocation3], 0
    %9 = vsyncpa [#allocation6], 0
    %10 = vsyncpa [#allocation4], 0
    // Predicated region
    $region2: #{tpu_custom_call.1} parent=1 // pred_check
      _
    $region3: #{tpu_custom_call.1} parent=1 // pred_check_branch
      %12 = sbr.rel (0) target = $region5
    $region4: #{tpu_custom_call.1} parent=1 // pred_region
      %s14 = ssub.s32 128, 128
      %15 = vsyncadd [#allocation3], %s14
      %s17 = sshll.u32 [#allocation2], 4
      %s18 = int_to_ptr.vmem [resolvable:$true] %s17
      %20 = dma.hbm_to_vmem [thread:$0]  %s0, 128, %s18, [#allocation3]
    $region5: #{tpu_custom_call.1} parent=1 // pred_fallthru
      _
    // Predicated region
    $region6: #{tpu_custom_call.1} parent=1 // pred_check
      _
    $region7: #{tpu_custom_call.1} parent=1 // pred_check_branch
      %22 = sbr.rel (0) target = $region9
    $region8: #{tpu_custom_call.1} parent=1 // pred_region
      %s24 = ssub.s32 6144, 6144
      %25 = vsyncadd [#allocation6], %s24
      %s26 = sshll.u32 [#allocation5], 4
      %s27 = int_to_ptr.vmem [resolvable:$true] %s26
      %32 = dma.hbm_to_vmem [thread:$0]  %s1, 6144, %s27, [#allocation6], 128, 128, 8
    $region9: #{tpu_custom_call.1} parent=1 // pred_fallthru
      _
    // Predicated region
    $region10: #{tpu_custom_call.1} parent=1 // pred_check
      _
    $region11: #{tpu_custom_call.1} parent=1 // pred_check_branch
      %34 = sbr.rel (0) target = $region13
    $region12: #{tpu_custom_call.1} parent=1 // pred_region
      _
    $region13: #{tpu_custom_call.1} parent=1 // pred_fallthru
      _
    // Predicated region
    $region14: #{tpu_custom_call.1} parent=1 // pred_check
      _
    $region15: #{tpu_custom_call.1} parent=1 // pred_check_branch
      %36 = sbr.rel (0) target = $region17
    $region16: #{tpu_custom_call.1} parent=1 // pred_region
      %37 = dma.done [#allocation3], 128
    $region17: #{tpu_custom_call.1} parent=1 // pred_fallthru
      _
    // Predicated region
    $region18: #{tpu_custom_call.1} parent=1 // pred_check
      _
    $region19: #{tpu_custom_call.1} parent=1 // pred_check_branch
      %39 = sbr.rel (0) target = $region21
    $region20: #{tpu_custom_call.1} parent=1 // pred_region
      %40 = dma.done [#allocation6], 6144
    $region21: #{tpu_custom_call.1} parent=1 // pred_fallthru
      _
    %v41 = vld [vmem:[#allocation2] sm:$0xff]
    %v42 = vld [vmem:[#allocation5] sm:$0xff]
    %v43 = vld [vmem:[#allocation5 + $0x8] sm:$0xff]
    %v44 = vld [vmem:[%s2] sm:$0x1]
    %v45 = vlaneseq
    %v46 = vshrl.u32 %v45, 7
    %v47 = vsub.s32 0, %v46
    %v48 = vrot.slane %v44, %v47
    %vm49 = vcmask 97280
    %v51 = vsel %vm49, %v41, 0
    %vm53 = vcmask 1043456
    %v55 = vsel %vm53, %v43, 0
    %57 = vmatprep.subr.mxu0 0.0
    %58 = vmatpush1.msra.mxu0 %v42
    %59 = vmatprep.subr.mxu0 0.0
    %60 = vmatpush1.msra.mxu0 %v55
    %61 = vmatprep.subr.mxu0 0.0
    %62 = vmatpush1.msra.mxu0 0.0
    %63 = vmatprep.subr.mxu0 0.0
    %64 = vmatpush1.msra.mxu0 0.0
    %65 = vmatprep.subr.mxu0 0.0
    %66 = vmatpush1.msra.mxu0 0.0
    %67 = vmatprep.subr.mxu0 0.0
    %68 = vmatpush1.msra.mxu0 0.0
    %69 = vmatprep.subr.mxu0 0.0
    %70 = vmatpush1.msra.mxu0 0.0
    %71 = vmatprep.subr.mxu0 0.0
    %72 = vmatpush1.msra.mxu0 0.0
    %73 = vmatprep.subr.mxu0 0.0
    %74 = vmatpush1.msra.mxu0 0.0
    %75 = vmatprep.subr.mxu0 0.0
    %76 = vmatpush1.msra.mxu0 0.0
    %77 = vmatprep.subr.mxu0 0.0
    %78 = vmatpush1.msra.mxu0 0.0
    %79 = vmatprep.subr.mxu0 0.0
    %80 = vmatpush1.msra.mxu0 0.0
    %81 = vmatprep.subr.mxu0 0.0
    %82 = vmatpush1.msra.mxu0 0.0
    %83 = vmatprep.subr.mxu0 0.0
    %84 = vmatpush1.msra.mxu0 0.0
    %85 = vmatprep.subr.mxu0 0.0
    %86 = vmatpush1.msra.mxu0 0.0
    %87 = vmatprep.subr.mxu0 0.0
    %88 = vmatpush1.msra.mxu0 0.0
    %89 = vmatprep.subr.mxu0 0.0
    %90 = vmatpush1.msra.mxu0 0.0
    %91 = vmatprep.subr.mxu0 0.0
    %92 = vmatpush1.msra.mxu0 0.0
    %93 = vmatprep.subr.mxu0 0.0
    %94 = vmatpush1.msra.mxu0 0.0
    %95 = vmatprep.subr.mxu0 0.0
    %96 = vmatpush1.msra.mxu0 0.0
    %97 = vmatprep.subr.mxu0 0.0
    %98 = vmatpush1.msra.mxu0 0.0
    %99 = vmatprep.subr.mxu0 0.0
    %100 = vmatpush1.msra.mxu0 0.0
    %101 = vmatprep.subr.mxu0 0.0
    %102 = vmatpush1.msra.mxu0 0.0
    %103 = vmatprep.subr.mxu0 0.0
    %104 = vmatpush1.msra.mxu0 0.0
    %105 = vmatprep.subr.mxu0 0.0
    %106 = vmatpush1.msra.mxu0 0.0
    %107 = vmatprep.subr.mxu0 0.0
    %108 = vmatpush1.msra.mxu0 0.0
    %109 = vmatprep.subr.mxu0 0.0
    %110 = vmatpush1.msra.mxu0 0.0
    %111 = vmatprep.subr.mxu0 0.0
    %112 = vmatpush1.msra.mxu0 0.0
    %113 = vmatprep.subr.mxu0 0.0
    %114 = vmatpush1.msra.mxu0 0.0
    %115 = vmatprep.subr.mxu0 0.0
    %116 = vmatpush1.msra.mxu0 0.0
    %117 = vmatprep.subr.mxu0 0.0
    %118 = vmatpush1.msra.mxu0 0.0
    %119 = vmatprep.subr.mxu0 0.0
    %120 = vmatpush1.msra.mxu0 0.0
    %121 = vmatprep.mubr.f32.mxu0 0.0
    %122 = vmatmul.mubr.f32.gmra.mrb[0].mxu0 %v51
    %v123 = vpop.f32.mrb[0].mxu0
    %v124 = vadd.f32 %v48, %v123
    %v125 = vpop.f32.mrb[0].mxu0
    %126 = vdwg.mxu0
    %v127 = vmax.f32 %v124, 0.0
    %s128 = scalar_lea.vmem [#allocation5], 128
    %v129 = vld [vmem:[%s128] sm:$0xff]
    %v130 = vld [vmem:[%s128 + $0x8] sm:$0xff]
    %v131 = vld [vmem:[%s128 + $0x10] sm:$0xff]
    %v132 = vld [vmem:[%s128 + $0x18] sm:$0xff]
    %v133 = vld [vmem:[%s128 + $0x20] sm:$0xff]
    %v134 = vld [vmem:[%s128 + $0x28] sm:$0xff]
    %v135 = vld [vmem:[%s128 + $0x30] sm:$0xff]
    %v136 = vld [vmem:[%s128 + $0x38] sm:$0xff]
    %v137 = vld [vmem:[%s128 + $0x40] sm:$0xff]
    %v138 = vld [vmem:[%s128 + $0x48] sm:$0xff]
    %v139 = vld [vmem:[%s128 + $0x50] sm:$0xff]
    %v140 = vld [vmem:[%s128 + $0x58] sm:$0xff]
    %v141 = vld [vmem:[%s128 + $0x60] sm:$0xff]
    %v142 = vld [vmem:[%s128 + $0x68] sm:$0xff]
    %v143 = vld [vmem:[%s128 + $0x70] sm:$0xff]
    %v144 = vld [vmem:[%s128 + $0x78] sm:$0xff]
    %v145 = vld [vmem:[%s2 + $0x1] sm:$0x1]
    %v146 = vlaneseq
    %v147 = vshrl.u32 %v146, 7
    %v148 = vsub.s32 0, %v147
    %v149 = vrot.slane %v145, %v148
    %150 = vmatprep.subr.mxu0 0.0
    %151 = vmatpush1.msra.mxu0 %v129
    %152 = vmatprep.subr.mxu0 0.0
    %153 = vmatpush1.msra.mxu0 %v130
    %154 = vmatprep.subr.mxu0 0.0
    %155 = vmatpush1.msra.mxu0 %v131
    %156 = vmatprep.subr.mxu0 0.0
    %157 = vmatpush1.msra.mxu0 %v132
    %158 = vmatprep.subr.mxu0 0.0
    %159 = vmatpush1.msra.mxu0 %v133
    %160 = vmatprep.subr.mxu0 0.0
    %161 = vmatpush1.msra.mxu0 %v134
    %162 = vmatprep.subr.mxu0 0.0
    %163 = vmatpush1.msra.mxu0 %v135
    %164 = vmatprep.subr.mxu0 0.0
    %165 = vmatpush1.msra.mxu0 %v136
    %166 = vmatprep.subr.mxu0 0.0
    %167 = vmatpush1.msra.mxu0 %v137
    %168 = vmatprep.subr.mxu0 0.0
    %169 = vmatpush1.msra.mxu0 %v138
    %170 = vmatprep.subr.mxu0 0.0
    %171 = vmatpush1.msra.mxu0 %v139
    %172 = vmatprep.subr.mxu0 0.0
    %173 = vmatpush1.msra.mxu0 %v140
    %174 = vmatprep.subr.mxu0 0.0
    %175 = vmatpush1.msra.mxu0 %v141
    %176 = vmatprep.subr.mxu0 0.0
    %177 = vmatpush1.msra.mxu0 %v142
    %178 = vmatprep.subr.mxu0 0.0
    %179 = vmatpush1.msra.mxu0 %v143
    %180 = vmatprep.subr.mxu0 0.0
    %181 = vmatpush1.msra.mxu0 %v144
    %182 = vmatprep.subr.mxu0 0.0
    %183 = vmatpush1.msra.mxu0 0.0
    %184 = vmatprep.subr.mxu0 0.0
    %185 = vmatpush1.msra.mxu0 0.0
    %186 = vmatprep.subr.mxu0 0.0
    %187 = vmatpush1.msra.mxu0 0.0
    %188 = vmatprep.subr.mxu0 0.0
    %189 = vmatpush1.msra.mxu0 0.0
    %190 = vmatprep.subr.mxu0 0.0
    %191 = vmatpush1.msra.mxu0 0.0
    %192 = vmatprep.subr.mxu0 0.0
    %193 = vmatpush1.msra.mxu0 0.0
    %194 = vmatprep.subr.mxu0 0.0
    %195 = vmatpush1.msra.mxu0 0.0
    %196 = vmatprep.subr.mxu0 0.0
    %197 = vmatpush1.msra.mxu0 0.0
    %198 = vmatprep.subr.mxu0 0.0
    %199 = vmatpush1.msra.mxu0 0.0
    %200 = vmatprep.subr.mxu0 0.0
    %201 = vmatpush1.msra.mxu0 0.0
    %202 = vmatprep.subr.mxu0 0.0
    %203 = vmatpush1.msra.mxu0 0.0
    %204 = vmatprep.subr.mxu0 0.0
    %205 = vmatpush1.msra.mxu0 0.0
    %206 = vmatprep.subr.mxu0 0.0
    %207 = vmatpush1.msra.mxu0 0.0
    %208 = vmatprep.subr.mxu0 0.0
    %209 = vmatpush1.msra.mxu0 0.0
    %210 = vmatprep.subr.mxu0 0.0
    %211 = vmatpush1.msra.mxu0 0.0
    %212 = vmatprep.subr.mxu0 0.0
    %213 = vmatpush1.msra.mxu0 0.0
    %214 = vmatprep.mubr.f32.mxu0 0.0
    %215 = vmatmul.mubr.f32.gmra.mrb[0].mxu0 %v127
    %v216 = vpop.f32.mrb[0].mxu0
    %v217 = vadd.f32 %v149, %v216
    %v218 = vpop.f32.mrb[0].mxu0
    %219 = vdwg.mxu0
    %v220 = vmax.f32 %v217, 0.0
    %s221 = scalar_lea.vmem [#allocation5], 256
    %v222 = vld [vmem:[%s221] sm:$0xff]
    %v223 = vld [vmem:[%s221 + $0x8] sm:$0xff]
    %v224 = vld [vmem:[%s221 + $0x10] sm:$0xff]
    %v225 = vld [vmem:[%s221 + $0x18] sm:$0xff]
    %v226 = vld [vmem:[%s221 + $0x20] sm:$0xff]
    %v227 = vld [vmem:[%s221 + $0x28] sm:$0xff]
    %v228 = vld [vmem:[%s221 + $0x30] sm:$0xff]
    %v229 = vld [vmem:[%s221 + $0x38] sm:$0xff]
    %v230 = vld [vmem:[%s221 + $0x40] sm:$0xff]
    %v231 = vld [vmem:[%s221 + $0x48] sm:$0xff]
    %v232 = vld [vmem:[%s221 + $0x50] sm:$0xff]
    %v233 = vld [vmem:[%s221 + $0x58] sm:$0xff]
    %v234 = vld [vmem:[%s221 + $0x60] sm:$0xff]
    %v235 = vld [vmem:[%s221 + $0x68] sm:$0xff]
    %v236 = vld [vmem:[%s221 + $0x70] sm:$0xff]
    %v237 = vld [vmem:[%s221 + $0x78] sm:$0xff]
    %v238 = vld [vmem:[%s2 + $0x2] sm:$0x1]
    %v239 = vlaneseq
    %v240 = vshrl.u32 %v239, 7
    %v241 = vsub.s32 0, %v240
    %v242 = vrot.slane %v238, %v241
    %243 = vmatprep.subr.mxu0 0.0
    %244 = vmatpush1.msra.mxu0 %v222
    %245 = vmatprep.subr.mxu0 0.0
    %246 = vmatpush1.msra.mxu0 %v223
    %247 = vmatprep.subr.mxu0 0.0
    %248 = vmatpush1.msra.mxu0 %v224
    %249 = vmatprep.subr.mxu0 0.0
    %250 = vmatpush1.msra.mxu0 %v225
    %251 = vmatprep.subr.mxu0 0.0
    %252 = vmatpush1.msra.mxu0 %v226
    %253 = vmatprep.subr.mxu0 0.0
    %254 = vmatpush1.msra.mxu0 %v227
    %255 = vmatprep.subr.mxu0 0.0
    %256 = vmatpush1.msra.mxu0 %v228
    %257 = vmatprep.subr.mxu0 0.0
    %258 = vmatpush1.msra.mxu0 %v229
    %259 = vmatprep.subr.mxu0 0.0
    %260 = vmatpush1.msra.mxu0 %v230
    %261 = vmatprep.subr.mxu0 0.0
    %262 = vmatpush1.msra.mxu0 %v231
    %263 = vmatprep.subr.mxu0 0.0
    %264 = vmatpush1.msra.mxu0 %v232
    %265 = vmatprep.subr.mxu0 0.0
    %266 = vmatpush1.msra.mxu0 %v233
    %267 = vmatprep.subr.mxu0 0.0
    %268 = vmatpush1.msra.mxu0 %v234
    %269 = vmatprep.subr.mxu0 0.0
    %270 = vmatpush1.msra.mxu0 %v235
    %271 = vmatprep.subr.mxu0 0.0
    %272 = vmatpush1.msra.mxu0 %v236
    %273 = vmatprep.subr.mxu0 0.0
    %274 = vmatpush1.msra.mxu0 %v237
    %275 = vmatprep.subr.mxu0 0.0
    %276 = vmatpush1.msra.mxu0 0.0
    %277 = vmatprep.subr.mxu0 0.0
    %278 = vmatpush1.msra.mxu0 0.0
    %279 = vmatprep.subr.mxu0 0.0
    %280 = vmatpush1.msra.mxu0 0.0
    %281 = vmatprep.subr.mxu0 0.0
    %282 = vmatpush1.msra.mxu0 0.0
    %283 = vmatprep.subr.mxu0 0.0
    %284 = vmatpush1.msra.mxu0 0.0
    %285 = vmatprep.subr.mxu0 0.0
    %286 = vmatpush1.msra.mxu0 0.0
    %287 = vmatprep.subr.mxu0 0.0
    %288 = vmatpush1.msra.mxu0 0.0
    %289 = vmatprep.subr.mxu0 0.0
    %290 = vmatpush1.msra.mxu0 0.0
    %291 = vmatprep.subr.mxu0 0.0
    %292 = vmatpush1.msra.mxu0 0.0
    %293 = vmatprep.subr.mxu0 0.0
    %294 = vmatpush1.msra.mxu0 0.0
    %295 = vmatprep.subr.mxu0 0.0
    %296 = vmatpush1.msra.mxu0 0.0
    %297 = vmatprep.subr.mxu0 0.0
    %298 = vmatpush1.msra.mxu0 0.0
    %299 = vmatprep.subr.mxu0 0.0
    %300 = vmatpush1.msra.mxu0 0.0
    %301 = vmatprep.subr.mxu0 0.0
    %302 = vmatpush1.msra.mxu0 0.0
    %303 = vmatprep.subr.mxu0 0.0
    %304 = vmatpush1.msra.mxu0 0.0
    %305 = vmatprep.subr.mxu0 0.0
    %306 = vmatpush1.msra.mxu0 0.0
    %307 = vmatprep.mubr.f32.mxu0 0.0
    %308 = vmatmul.mubr.f32.gmra.mrb[0].mxu0 %v220
    %v309 = vpop.f32.mrb[0].mxu0
    %v310 = vadd.f32 %v242, %v309
    %v311 = vpop.f32.mrb[0].mxu0
    %312 = vdwg.mxu0
    %313 = vst [vmem:[#allocation7] sm:$0xff] %v310
    // Predicated region
    $region22: #{tpu_custom_call.1} parent=1 // pred_check
      _
    $region23: #{tpu_custom_call.1} parent=1 // pred_check_branch
      %315 = sbr.rel (0) target = $region25
    $region24: #{tpu_custom_call.1} parent=1 // pred_region
      %s317 = ssub.s32 128, 128
      %318 = vsyncadd [#allocation4], %s317
      %s320 = sshll.u32 [#allocation7], 4
      %s321 = int_to_ptr.vmem [resolvable:$true] %s320
      %323 = dma.vmem_to_hbm [thread:$0]  %s321, 128, %s3, [#allocation4]
    $region25: #{tpu_custom_call.1} parent=1 // pred_fallthru
      _
    // Predicated region
    $region26: #{tpu_custom_call.1} parent=1 // pred_check
      _
    $region27: #{tpu_custom_call.1} parent=1 // pred_check_branch
      %325 = sbr.rel (0) target = $region29
    $region28: #{tpu_custom_call.1} parent=1 // pred_region
      %326 = dma.done [#allocation4], 128
    $region29: #{tpu_custom_call.1} parent=1 // pred_fallthru
      _
    %327 = vsyncpa [#allocation3], 1
    %328 = vsyncpa [#allocation6], 1
    %329 = vsyncpa [#allocation4], 1

</llo_original>
